<compile_context>
chip_gen: v5e
topology: v5e:2x2
jax: 0.10.0
libtpu: 0.0.40
codegen_flags: <defaults>
</compile_context>

<pallas_src>
import functools

import jax
import jax.numpy as jnp
from jax import lax
from jax.experimental import pallas as pl
from jax.experimental.pallas import tpu as pltpu


def _vmem_limit_bytes():
    """Per-generation scoped-VMEM budget (v5e/v6e: 128 MiB physical, v7x: 64 MiB)."""
    try:
        cap = int(pltpu.get_tpu_info().vmem_capacity_bytes)
    except Exception:
        cap = 64 * 1024 * 1024          # conservative (v7x) if the query is unavailable
    return int(min(cap * 3 // 4, 100 * 1024 * 1024))


def _invariant_spec(block_shape, index_map, single_buffer):
    """BlockSpec for a grid-invariant operand (weights / biases).

    single_buffer=True requests a 1-deep pipeline (pl.Buffered(1)): the index
    map is constant, so a second buffer would only double VMEM use.
    """
    if single_buffer:
        return pl.BlockSpec(block_shape, index_map, pipeline_mode=pl.Buffered(1))
    return pl.BlockSpec(block_shape, index_map)


def _try_single_buffer(run_fn, single_buffer_weights):
    """Prefer single-buffered invariant operands; fall back if this JAX build
    rejects pl.Buffered(1) on a pallas_call BlockSpec."""
    if single_buffer_weights:
        try:
            return run_fn(True)
        except Exception:
            pass
    return run_fn(False)


def _input_projection_kernel(x_ref, wih_ref, bias_ref, gi_ref):
    """gi = x @ W_ih^T + (b_ih + [b_hh_r, b_hh_z, 0]) for one row block.

    bf16 MXU operands with f32 accumulation; the result is stored bf16 (gi is
    the largest HBM intermediate).
    """
    x_bf16 = x_ref[...].astype(jnp.bfloat16)          # x stays f32 in HBM; cast on-chip
    gi = jnp.dot(x_bf16, wih_ref[...], preferred_element_type=jnp.float32)
    gi_ref[...] = (gi + bias_ref[...]).astype(gi_ref.dtype)


def _gru_recurrent_kernel(*refs, t_blk, hidden_size, use_residual):
    """GRU recurrence over one (batch block, time block), PyTorch gate order (r,z,n).

    b_ih and the r/z parts of b_hh are already inside gi; only b_hh_n is added
    here (inside the r* product, exactly as nn.GRU does).  NOTE: h is cast to
    bf16 for the MXU each step (mirrored in the reference); very long
    sequences will drift slightly from an f32 nn.GRU.
    """
    if use_residual:
        gi_ref, whh_ref, bhhn_ref, x_ref, y_ref, h_ref, gi32_ref = refs
    else:
        gi_ref, whh_ref, bhhn_ref, y_ref, h_ref, gi32_ref = refs
        x_ref = None

    H = hidden_size
    ti = pl.program_id(1)

    @pl.when(ti == 0)                                  # re-fires for every batch block
    def _():
        h_ref[...] = jnp.zeros_like(h_ref)

    # One static, full-block upcast so the per-step dynamic time slice below is
    # on a 32-bit ref (the bf16 copy only ever crosses HBM).
    gi32_ref[...] = gi_ref[...].astype(jnp.float32)

    def step(j, h):
        gi = gi32_ref[:, pl.ds(j, 1), :][:, 0, :]                       # (N, 3H) f32
        gh = jnp.dot(h.astype(jnp.bfloat16), whh_ref[...],
                     preferred_element_type=jnp.float32)                # (N, 3H) f32
        r = jax.nn.sigmoid(gi[:, 0:H] + gh[:, 0:H])
        z = jax.nn.sigmoid(gi[:, H:2 * H] + gh[:, H:2 * H])
        cand = jnp.tanh(gi[:, 2 * H:3 * H] + r * (gh[:, 2 * H:3 * H] + bhhn_ref[...]))
        h_new = (1.0 - z) * cand + z * h
        out = h_new
        if use_residual:
            out = out + x_ref[:, pl.ds(j, 1), :][:, 0, :]               # f32 residual
        y_ref[:, pl.ds(j, 1), :] = out[:, None, :]
        return h_new

    h_ref[...] = lax.fori_loop(0, t_blk, step, h_ref[...], unroll=True)


def temporal_encoder_forward(x, params, *, use_residual=True,
                             residual_feature_dim=2048,
                             t_blk=8, r_blk=512, n_blk_max=256,
                             single_buffer_weights=True):
    """x: (n, t, f) float32.  params = (w_ih, w_hh, b_ih, b_hh) in PyTorch
    nn.GRU layout ((3H,F), (3H,H), (3H,), (3H,)).  Returns (n, t, H) float32."""
    n, t, f = x.shape
    w_ih, w_hh, b_ih, b_hh = params
    hidden = w_hh.shape[1]
    three_h = 3 * hidden
    # PyTorch VIBE applies the residual iff y.shape[-1] == 2048 (the GRU input
    # width); residual_feature_dim lets small test shapes exercise that path.
    apply_residual = bool(use_residual) and hidden == residual_feature_dim and hidden == f

    vmem_limit = _vmem_limit_bytes()

    x = x.astype(jnp.float32)
    wih_t = jnp.transpose(w_ih).astype(jnp.bfloat16)       # (F, 3H)  MXU-native
    whh_t = jnp.transpose(w_hh).astype(jnp.bfloat16)       # (H, 3H)
    # Fold the r/z parts of b_hh into the stage-1 bias; b_hh_n must stay inside
    # the recurrence (nn.GRU applies it inside the r* product).
    bias1 = (b_ih + jnp.concatenate([b_hh[:hidden], b_hh[hidden:2 * hidden],
                                     jnp.zeros((hidden,), b_hh.dtype)]))
    bias1 = bias1.reshape(1, three_h).astype(jnp.float32)
    bhh_n = b_hh[2 * hidden:].reshape(1, hidden).astype(jnp.float32)

    # ---- stage 1: batched input projection (parallel grid, big matmul) ------
    rows = n * t
    wih_bytes = f * three_h * 2                            # single-buffered bf16 weight
    per_row = 2 * (f * 4 + three_h * 2)                    # x f32 + gi bf16, double-buffered
    fit = max(8, (vmem_limit - wih_bytes) // per_row)
    rb = int(min(r_blk, rows, fit))
    if rb < rows:
        rb = max(8, (rb // 8) * 8)                         # (8,128) rule on the row dim
    x2d = x.reshape(rows, f)                               # row-major reshape, free
    # TODO(synk): for H well above 2048, additionally tile the 3H output columns
    # so the single-buffered W_ih^T tile stays small on v7x's 64 MiB VMEM.

    def run_stage1(single_buffer):
        return pl.pallas_call(
            _input_projection_kernel,
            out_shape=jax.ShapeDtypeStruct((rows, three_h), jnp.bfloat16),
            grid_spec=pltpu.PrefetchScalarGridSpec(
                num_scalar_prefetch=0,
                grid=(pl.cdiv(rows, rb),),
                in_specs=[
                    pl.BlockSpec((rb, f), lambda i: (i, 0)),                     # x rows
                    _invariant_spec((f, three_h), lambda i: (0, 0), single_buffer),   # W_ih^T
                    _invariant_spec((1, three_h), lambda i: (0, 0), single_buffer),   # bias
                ],
                out_specs=pl.BlockSpec((rb, three_h), lambda i: (i, 0)),
            ),
            compiler_params=pltpu.CompilerParams(
                dimension_semantics=("parallel",),
                vmem_limit_bytes=vmem_limit),
        )(x2d, wih_t, bias1)

    gi2d = _try_single_buffer(run_stage1, single_buffer_weights)
    gi = gi2d.reshape(n, t, three_h)

    # ---- stage 2: recurrence, parallel over batch, sequential over time -----
    tb = t if t <= t_blk else int(t_blk)
    if tb < t and tb % 8:
        tb = max(8, (tb // 8) * 8)                         # (8,128) rule on the time dim
    whh_bytes = hidden * three_h * 2                       # single-buffered bf16 weight
    per_batch_row = (2 * tb * three_h * 2                  # gi bf16 (double-buffered)
                     + tb * three_h * 4                    # gi f32 upcast scratch
                     + 2 * tb * hidden * 4                 # y f32 (double-buffered)
                     + (2 * tb * f * 4 if apply_residual else 0)   # residual x
                     + hidden * 4)                         # h state
    fit_n = max(1, (vmem_limit - whh_bytes) // per_batch_row)
    n_blk = int(min(n, n_blk_max, fit_n))
    # TODO(synk): pad n_blk up to the MXU row granule (256 on v6e/v7x, 128 on
    # v5e) for better h @ W_hh row fill, and force >=2 batch blocks on v7x so
    # both TensorCores get work even for small n.

    kernel = functools.partial(_gru_recurrent_kernel, t_blk=tb,
                               hidden_size=hidden, use_residual=apply_residual)

    def run_stage2(single_buffer):
        in_specs = [
            pl.BlockSpec((n_blk, tb, three_h), lambda bi, ti: (bi, ti, 0)),          # gi
            _invariant_spec((hidden, three_h), lambda bi, ti: (0, 0), single_buffer),  # W_hh^T
            _invariant_spec((1, hidden), lambda bi, ti: (0, 0), single_buffer),        # b_hh_n
        ]
        args = [gi, whh_t, bhh_n]
        if apply_residual:                                  # skip the x DMA entirely otherwise
            in_specs.append(pl.BlockSpec((n_blk, tb, f), lambda bi, ti: (bi, ti, 0)))
            args.append(x)
        return pl.pallas_call(
            kernel,
            out_shape=jax.ShapeDtypeStruct((n, t, hidden), jnp.float32),
            grid_spec=pltpu.PrefetchScalarGridSpec(
                num_scalar_prefetch=0,
                grid=(pl.cdiv(n, n_blk), pl.cdiv(t, tb)),
                in_specs=in_specs,
                out_specs=pl.BlockSpec((n_blk, tb, hidden), lambda bi, ti: (bi, ti, 0)),
                scratch_shapes=[pltpu.VMEM((n_blk, hidden), jnp.float32),        # h state
                                pltpu.VMEM((n_blk, tb, three_h), jnp.float32)],  # gi f32
            ),
            compiler_params=pltpu.CompilerParams(
                dimension_semantics=("parallel", "arbitrary"),
                vmem_limit_bytes=vmem_limit),
        )(*args)

    return _try_single_buffer(run_stage2, single_buffer_weights)


def _reference_forward(x, params, *, use_residual=True, residual_feature_dim=2048):
    """Plain-JAX reference mirroring the kernel numerics (bf16 matmul operands,
    f32 accumulation, bf16-stored gi, f32 gate math & residual)."""
    w_ih, w_hh, b_ih, b_hh = params
    hidden = w_hh.shape[1]
    n, t, f = x.shape
    bf = lambda a: a.astype(jnp.bfloat16).astype(jnp.float32)

    x_tnf = jnp.transpose(x, (1, 0, 2)).astype(jnp.float32)     # (T, N, F)
    bias1 = b_ih + jnp.concatenate([b_hh[:hidden], b_hh[hidden:2 * hidden],
                                    jnp.zeros((hidden,), b_hh.dtype)])
    gi_all = jnp.einsum('tnf,gf->tng', bf(x_tnf), bf(w_ih)) + bias1
    gi_all = bf(gi_all)                                         # kernel stores gi in bf16
    bhh_n = b_hh[2 * hidden:]
    whh_t = bf(w_hh).T
    h0 = jnp.zeros((n, hidden), jnp.float32)

    def step(h, gi):
        gh = jnp.dot(bf(h), whh_t)
        r = jax.nn.sigmoid(gi[:, :hidden] + gh[:, :hidden])
        z = jax.nn.sigmoid(gi[:, hidden:2 * hidden] + gh[:, hidden:2 * hidden])
        cand = jnp.tanh(gi[:, 2 * hidden:] + r * (gh[:, 2 * hidden:] + bhh_n))
        h_new = (1.0 - z) * cand + z * h
        return h_new, h_new

    _, y = jax.lax.scan(step, h0, gi_all)
    if use_residual and hidden == residual_feature_dim and hidden == f:
        y = y + x_tnf
    return jnp.transpose(y, (1, 0, 2))


if __name__ == "__main__":
    # Small TPU-tile-friendly stand-in for the real (batch, seq, 2048) shapes.
    N, T, F = 8, 16, 128
    HIDDEN = 128            # hidden == feature dim -> residual path is active

    key = jax.random.PRNGKey(0)
    k_x, k_wih, k_whh, k_bih, k_bhh = jax.random.split(key, 5)
    x = jax.random.normal(k_x, (N, T, F), dtype=jnp.float32)

    # PyTorch-style uniform(-1/sqrt(H), 1/sqrt(H)) init, gate order (r, z, n).
    bound = 1.0 / (HIDDEN ** 0.5)
    w_ih = jax.random.uniform(k_wih, (3 * HIDDEN, F), jnp.float32, -bound, bound)
    w_hh = jax.random.uniform(k_whh, (3 * HIDDEN, HIDDEN), jnp.float32, -bound, bound)
    b_ih = jax.random.uniform(k_bih, (3 * HIDDEN,), jnp.float32, -bound, bound)
    b_hh = jax.random.uniform(k_bhh, (3 * HIDDEN,), jnp.float32, -bound, bound)
    params = (w_ih, w_hh, b_ih, b_hh)

    y = jax.block_until_ready(temporal_encoder_forward(
        x, params, use_residual=True, residual_feature_dim=HIDDEN))
    y_ref = jax.block_until_ready(_reference_forward(
        x, params, use_residual=True, residual_feature_dim=HIDDEN))

    assert y.shape == (N, T, HIDDEN)
    max_err = float(jnp.max(jnp.abs(y - y_ref)))
    assert jnp.allclose(y, y_ref, atol=2e-2, rtol=2e-2), (
        f"mismatch vs JAX reference, max abs err = {max_err}")

    print("KERNEL_OK")
</pallas_src>

<mosaic_0001>
module attributes {stable_mosaic.version = 11 : i64} {
  func.func @_input_projection_kernel(%arg0: i32, %arg1: memref<128x128xf32, #tpu.memory_space<vmem>>, %arg2: memref<128x384xbf16, #tpu.memory_space<vmem>>, %arg3: memref<1x384xf32, #tpu.memory_space<vmem>>, %arg4: memref<128x384xbf16, #tpu.memory_space<vmem>>) attributes {dimension_semantics = [#tpu.dimension_semantics<parallel>], iteration_bounds = array<i64: 1>, scalar_prefetch = 0 : i64, scratch_operands = 0 : i64, tpu.core_type = #tpu.core_type<tc>, window_params = [{transform_indices = @transform_0, window_bounds = array<i64: 128, 128>}, {pipeline_mode = #tpu.pipeline_mode<synchronous>, transform_indices = @transform_1, window_bounds = array<i64: 128, 384>}, {pipeline_mode = #tpu.pipeline_mode<synchronous>, transform_indices = @transform_2, window_bounds = array<i64: 1, 384>}, {transform_indices = @transform_3, window_bounds = array<i64: 128, 384>}]} {
    %c0 = arith.constant 0 : index
    %c0_0 = arith.constant 0 : index
    %0 = vector.load %arg1[%c0, %c0_0] : memref<128x128xf32, #tpu.memory_space<vmem>>, vector<128x128xf32>
    %1 = arith.truncf %0 : vector<128x128xf32> to vector<128x128xbf16>
    %c0_1 = arith.constant 0 : index
    %c0_2 = arith.constant 0 : index
    %2 = vector.load %arg2[%c0_1, %c0_2] : memref<128x384xbf16, #tpu.memory_space<vmem>>, vector<128x384xbf16>
    %cst = arith.constant dense<0.000000e+00> : vector<128x384xf32>
    %3 = tpu.matmul %1, %2, %cst {dimension_numbers = #tpu.dot_dimension_numbers<[1], [0], [0], [1], [0, 0, 1, 1], [], []>} : vector<128x128xbf16>, vector<128x384xbf16>, vector<128x384xf32> -> vector<128x384xf32>
    %c0_3 = arith.constant 0 : index
    %c0_4 = arith.constant 0 : index
    %4 = vector.load %arg3[%c0_3, %c0_4] : memref<1x384xf32, #tpu.memory_space<vmem>>, vector<1x384xf32>
    %5 = vector.broadcast %4 : vector<1x384xf32> to vector<128x384xf32>
    %6 = arith.addf %3, %5 : vector<128x384xf32>
    %7 = arith.truncf %6 : vector<128x384xf32> to vector<128x384xbf16>
    %c0_5 = arith.constant 0 : index
    %c0_6 = arith.constant 0 : index
    %8 = vector.load %arg4[%c0_5, %c0_6] : memref<128x384xbf16, #tpu.memory_space<vmem>>, vector<128x384xbf16>
    tpu.vector_store %arg4[%c0_5, %c0_6], %7 {strides = array<i32>} : memref<128x384xbf16, #tpu.memory_space<vmem>>, vector<128x384xbf16>,
    return
  }
  func.func @transform_0(%arg0: i32) -> (i32, i32) {
    %c0_i32 = arith.constant 0 : i32
    %c0_i32_0 = arith.constant 0 : i32
    return %arg0, %c0_i32 : i32, i32
  }
  func.func @transform_1(%arg0: i32) -> (i32, i32) {
    %c0_i32 = arith.constant 0 : i32
    %c0_i32_0 = arith.constant 0 : i32
    %c0_i32_1 = arith.constant 0 : i32
    return %c0_i32, %c0_i32_0 : i32, i32
  }
  func.func @transform_2(%arg0: i32) -> (i32, i32) {
    %c0_i32 = arith.constant 0 : i32
    %c0_i32_0 = arith.constant 0 : i32
    %c0_i32_1 = arith.constant 0 : i32
    return %c0_i32, %c0_i32_0 : i32, i32
  }
  func.func @transform_3(%arg0: i32) -> (i32, i32) {
    %c0_i32 = arith.constant 0 : i32
    %c0_i32_0 = arith.constant 0 : i32
    return %arg0, %c0_i32 : i32, i32
  }
}

module attributes {stable_mosaic.version = 11 : i64} {
  func.func @_input_projection_kernel(%arg0: i32, %arg1: memref<128x128xf32, #tpu.memory_space<vmem>>, %arg2: memref<128x384xbf16, #tpu.memory_space<vmem>>, %arg3: memref<1x384xf32, #tpu.memory_space<vmem>>, %arg4: memref<128x384xbf16, #tpu.memory_space<vmem>>) attributes {dimension_semantics = [#tpu.dimension_semantics<parallel>], iteration_bounds = array<i64: 1>, scalar_prefetch = 0 : i64, scratch_operands = 0 : i64, tpu.core_type = #tpu.core_type<tc>, window_params = [{transform_indices = @transform_0, window_bounds = array<i64: 128, 128>}, {pipeline_mode = #tpu.pipeline_mode<synchronous>, transform_indices = @transform_1, window_bounds = array<i64: 128, 384>}, {pipeline_mode = #tpu.pipeline_mode<synchronous>, transform_indices = @transform_2, window_bounds = array<i64: 1, 384>}, {transform_indices = @transform_3, window_bounds = array<i64: 128, 384>}]} {
    %c0 = arith.constant 0 : index
    %c0_0 = arith.constant 0 : index
    %0 = vector.load %arg1[%c0, %c0_0] : memref<128x128xf32, #tpu.memory_space<vmem>>, vector<128x128xf32>
    %1 = arith.truncf %0 : vector<128x128xf32> to vector<128x128xbf16>
    %c0_1 = arith.constant 0 : index
    %c0_2 = arith.constant 0 : index
    %2 = vector.load %arg2[%c0_1, %c0_2] : memref<128x384xbf16, #tpu.memory_space<vmem>>, vector<128x384xbf16>
    %cst = arith.constant dense<0.000000e+00> : vector<128x384xf32>
    %3 = tpu.matmul %1, %2, %cst {dimension_numbers = #tpu.dot_dimension_numbers<[1], [0], [0], [1], [0, 0, 1, 1], [], []>} : vector<128x128xbf16>, vector<128x384xbf16>, vector<128x384xf32> -> vector<128x384xf32>
    %c0_3 = arith.constant 0 : index
    %c0_4 = arith.constant 0 : index
    %4 = vector.load %arg3[%c0_3, %c0_4] : memref<1x384xf32, #tpu.memory_space<vmem>>, vector<1x384xf32>
    %5 = vector.broadcast %4 : vector<1x384xf32> to vector<128x384xf32>
    %6 = arith.addf %3, %5 : vector<128x384xf32>
    %7 = arith.truncf %6 : vector<128x384xf32> to vector<128x384xbf16>
    %c0_5 = arith.constant 0 : index
    %c0_6 = arith.constant 0 : index
    %8 = vector.load %arg4[%c0_5, %c0_6] : memref<128x384xbf16, #tpu.memory_space<vmem>>, vector<128x384xbf16>
    tpu.vector_store %arg4[%c0_5, %c0_6], %7 {strides = array<i32>} : memref<128x384xbf16, #tpu.memory_space<vmem>>, vector<128x384xbf16>,
    return
  }
  func.func @transform_0(%arg0: i32) -> (i32, i32) {
    %c0_i32 = arith.constant 0 : i32
    %c0_i32_0 = arith.constant 0 : i32
    return %arg0, %c0_i32 : i32, i32
  }
  func.func @transform_1(%arg0: i32) -> (i32, i32) {
    %c0_i32 = arith.constant 0 : i32
    %c0_i32_0 = arith.constant 0 : i32
    %c0_i32_1 = arith.constant 0 : i32
    return %c0_i32, %c0_i32_0 : i32, i32
  }
  func.func @transform_2(%arg0: i32) -> (i32, i32) {
    %c0_i32 = arith.constant 0 : i32
    %c0_i32_0 = arith.constant 0 : i32
    %c0_i32_1 = arith.constant 0 : i32
    return %c0_i32, %c0_i32_0 : i32, i32
  }
  func.func @transform_3(%arg0: i32) -> (i32, i32) {
    %c0_i32 = arith.constant 0 : i32
    %c0_i32_0 = arith.constant 0 : i32
    return %arg0, %c0_i32 : i32, i32
  }
}

</mosaic_0001>

<llo_original>
// kernel: tpu_custom_call.1
$region0: #{tpu_custom_call.1}
  #allocation0 [shape = 'u32[]', space=smem, size = 0x4, offset = 0x4, fixed_abs, tag = 'smem constant byte address 0x4 - core index']
  #allocation1 [shape = 'u32[72,128]{1,0:T(1,128)}', space=vmem, size = 0x9000, scoped, tag = 'internal scratch']
  %s0 = inlined_call_operand.hbm [shape: f32[128,128], index: 0, kind: input, shape index: {}]
  %s1 = inlined_call_operand.hbm [shape: bf16[128,384], index: 1, kind: input, shape index: {}]
  %s2 = inlined_call_operand.hbm [shape: f32[1,384], index: 2, kind: input, shape index: {}]
  %s3 = inlined_call_operand.hbm [shape: bf16[128,384], index: 3, kind: output, shape index: {}]
  %s4 = sld [smem:[#allocation0]]
  $region34: #{tpu_custom_call.1} parent=0
    _
  %s6 = ssub.s32 1, %s4
  %s7 = scalar_select 0, %s6, %s4
  $region1: #{tpu_custom_call.1} parent=0
    #allocation2 [shape = 'u8[65536]{0}', space=vmem, size = 0x10000, scoped, tag = 'input window, operand 0, single buffered']
    #allocation3 [shape = 's32[1]{0}', space=sflag, size = 0x4, scoped, tag = 'scoped memory for tpu_custom_call.1']
    #allocation4 [shape = 's32[1]{0}', space=sflag, size = 0x4, scoped, tag = 'scoped memory for tpu_custom_call.1']
    #allocation5 [shape = 'u8[98304]{0}', space=vmem, size = 0x18000, scoped, tag = 'input window, operand 1, single buffered']
    #allocation6 [shape = 's32[1]{0}', space=sflag, size = 0x4, scoped, tag = 'scoped memory for tpu_custom_call.1']
    #allocation7 [shape = 'u8[1536]{0}', space=vmem, size = 0x800, scoped, tag = 'input window, operand 2, single buffered']
    #allocation8 [shape = 'u8[98304]{0}', space=vmem, size = 0x18000, scoped, tag = 'output window, operand 0, single buffered']
    %8 = vsyncpa [#allocation3], 0
    %9 = vsyncpa [#allocation6], 0
    %10 = vsyncpa [#allocation4], 0
    // Predicated region
    $region2: #{tpu_custom_call.1} parent=1 // pred_check
      _
    $region3: #{tpu_custom_call.1} parent=1 // pred_check_branch
      %12 = sbr.rel (0) target = $region5
    $region4: #{tpu_custom_call.1} parent=1 // pred_region
      %14 = vsyncadd [#allocation3], 0
      %s15 = sshll.u32 %s0, 4
      %s16 = int_to_ptr.hbm [resolvable:$true] %s15
      %s17 = sshll.u32 [#allocation2], 4
      %s18 = int_to_ptr.vmem [resolvable:$true] %s17
      %23 = dma.hbm_to_vmem [thread:$0]  %s16, 2048, %s18, [#allocation3], 128, 128, 8
    $region5: #{tpu_custom_call.1} parent=1 // pred_fallthru
      _
    // Predicated region
    $region6: #{tpu_custom_call.1} parent=1 // pred_check
      _
    $region7: #{tpu_custom_call.1} parent=1 // pred_check_branch
      %25 = sbr.rel (0) target = $region9
    $region8: #{tpu_custom_call.1} parent=1 // pred_region
      %27 = vsyncadd [#allocation6], 0
      %s28 = sshll.u32 %s1, 4
      %s29 = int_to_ptr.hbm [resolvable:$true] %s28
      %s30 = sshll.u32 [#allocation5], 4
      %s31 = int_to_ptr.vmem [resolvable:$true] %s30
      %36 = dma.hbm_to_vmem [thread:$0]  %s29, 3072, %s31, [#allocation6], 192, 192, 12
    $region9: #{tpu_custom_call.1} parent=1 // pred_fallthru
      _
    // Predicated region
    $region10: #{tpu_custom_call.1} parent=1 // pred_check
      _
    $region11: #{tpu_custom_call.1} parent=1 // pred_check_branch
      %38 = sbr.rel (0) target = $region13
    $region12: #{tpu_custom_call.1} parent=1 // pred_region
      %40 = vsyncadd [#allocation6], 0
      %s42 = sshll.u32 %s2, 4
      %s43 = int_to_ptr.hbm [resolvable:$true] %s42
      %s44 = sshll.u32 [#allocation7], 4
      %s45 = int_to_ptr.vmem [resolvable:$true] %s44
      %47 = dma.hbm_to_vmem [thread:$0]  %s43, 48, %s45, [#allocation6]
    $region13: #{tpu_custom_call.1} parent=1 // pred_fallthru
      _
    // Predicated region
    $region14: #{tpu_custom_call.1} parent=1 // pred_check
      _
    $region15: #{tpu_custom_call.1} parent=1 // pred_check_branch
      %49 = sbr.rel (0) target = $region17
    $region16: #{tpu_custom_call.1} parent=1 // pred_region
      %51 = dma.done [#allocation3], 2048
    $region17: #{tpu_custom_call.1} parent=1 // pred_fallthru
      _
    // Predicated region
    $region18: #{tpu_custom_call.1} parent=1 // pred_check
      _
    $region19: #{tpu_custom_call.1} parent=1 // pred_check_branch
      %53 = sbr.rel (0) target = $region21
    $region20: #{tpu_custom_call.1} parent=1 // pred_region
      %55 = dma.done [#allocation6], 3072
    $region21: #{tpu_custom_call.1} parent=1 // pred_fallthru
      _
    // Predicated region
    $region22: #{tpu_custom_call.1} parent=1 // pred_check
      _
    $region23: #{tpu_custom_call.1} parent=1 // pred_check_branch
      %57 = sbr.rel (0) target = $region25
    $region24: #{tpu_custom_call.1} parent=1 // pred_region
      %59 = dma.done [#allocation6], 48
    $region25: #{tpu_custom_call.1} parent=1 // pred_fallthru
      _
    %v60 = vld [vmem:[#allocation2] sm:$0xff]
    %v61 = vld [vmem:[#allocation2 + $0x8] sm:$0xff]
    %v62 = vld [vmem:[#allocation2 + $0x10] sm:$0xff]
    %v63 = vld [vmem:[#allocation2 + $0x18] sm:$0xff]
    %v64 = vld [vmem:[#allocation2 + $0x20] sm:$0xff]
    %v65 = vld [vmem:[#allocation2 + $0x28] sm:$0xff]
    %v66 = vld [vmem:[#allocation2 + $0x30] sm:$0xff]
    %v67 = vld [vmem:[#allocation2 + $0x38] sm:$0xff]
    %v68 = vld [vmem:[#allocation2 + $0x40] sm:$0xff]
    %v69 = vld [vmem:[#allocation2 + $0x48] sm:$0xff]
    %v70 = vld [vmem:[#allocation2 + $0x50] sm:$0xff]
    %v71 = vld [vmem:[#allocation2 + $0x58] sm:$0xff]
    %v72 = vld [vmem:[#allocation2 + $0x60] sm:$0xff]
    %v73 = vld [vmem:[#allocation2 + $0x68] sm:$0xff]
    %v74 = vld [vmem:[#allocation2 + $0x70] sm:$0xff]
    %v75 = vld [vmem:[#allocation2 + $0x78] sm:$0xff]
    %v76 = vpack.c.bf16 %v61, %v60
    %v77 = vpack.c.bf16 %v63, %v62
    %v78 = vpack.c.bf16 %v65, %v64
    %v79 = vpack.c.bf16 %v67, %v66
    %v80 = vpack.c.bf16 %v69, %v68
    %v81 = vpack.c.bf16 %v71, %v70
    %v82 = vpack.c.bf16 %v73, %v72
    %v83 = vpack.c.bf16 %v75, %v74
    %v84 = vld [vmem:[#allocation5] sm:$0xff]
    %v85 = vld [vmem:[#allocation5 + $0x8] sm:$0xf]
    %v86 = vld [vmem:[#allocation5 + $0xc] sm:$0xff]
    %v87 = vld [vmem:[#allocation5 + $0x14] sm:$0xf]
    %v88 = vld [vmem:[#allocation5 + $0x18] sm:$0xff]
    %v89 = vld [vmem:[#allocation5 + $0x20] sm:$0xf]
    %v90 = vld [vmem:[#allocation5 + $0x24] sm:$0xff]
    %v91 = vld [vmem:[#allocation5 + $0x2c] sm:$0xf]
    %v92 = vld [vmem:[#allocation5 + $0x30] sm:$0xff]
    %v93 = vld [vmem:[#allocation5 + $0x38] sm:$0xf]
    %v94 = vld [vmem:[#allocation5 + $0x3c] sm:$0xff]
    %v95 = vld [vmem:[#allocation5 + $0x44] sm:$0xf]
    %v96 = vld [vmem:[#allocation5 + $0x48] sm:$0xff]
    %v97 = vld [vmem:[#allocation5 + $0x50] sm:$0xf]
    %v98 = vld [vmem:[#allocation5 + $0x54] sm:$0xff]
    %v99 = vld [vmem:[#allocation5 + $0x5c] sm:$0xf]
    %v100 = vld [vmem:[#allocation5 + $0x60] sm:$0xff]
    %v101 = vld [vmem:[#allocation5 + $0x68] sm:$0xf]
    %v102 = vld [vmem:[#allocation5 + $0x6c] sm:$0xff]
    %v103 = vld [vmem:[#allocation5 + $0x74] sm:$0xf]
    %v104 = vld [vmem:[#allocation5 + $0x78] sm:$0xff]
    %v105 = vld [vmem:[#allocation5 + $0x80] sm:$0xf]
    %v106 = vld [vmem:[#allocation5 + $0x84] sm:$0xff]
    %v107 = vld [vmem:[#allocation5 + $0x8c] sm:$0xf]
    %v108 = vld [vmem:[#allocation5 + $0x90] sm:$0xff]
    %v109 = vld [vmem:[#allocation5 + $0x98] sm:$0xf]
    %v110 = vld [vmem:[#allocation5 + $0x9c] sm:$0xff]
    %v111 = vld [vmem:[#allocation5 + $0xa4] sm:$0xf]
    %v112 = vld [vmem:[#allocation5 + $0xa8] sm:$0xff]
    %v113 = vld [vmem:[#allocation5 + $0xb0] sm:$0xf]
    %v114 = vld [vmem:[#allocation5 + $0xb4] sm:$0xff]
    %v115 = vld [vmem:[#allocation5 + $0xbc] sm:$0xf]
    %v116 = vld [vmem:[#allocation7] sm:$0x7]
    %v118 = vperm.slane %v116, 0
    %v119 = vperm.slane %v116, 1
    %v120 = vperm.slane %v116, 2
    %v156 = vunpack.c.l.b16 %v84
    %v157 = vunpack.c.h.b16 %v84
    %v158 = vunpack.c.l.b16 %v85
    %v159 = vunpack.c.l.b16 %v86
    %v160 = vunpack.c.h.b16 %v86
    %v161 = vunpack.c.l.b16 %v87
    %v162 = vunpack.c.l.b16 %v88
    %v163 = vunpack.c.h.b16 %v88
    %v164 = vunpack.c.l.b16 %v89
    %v165 = vunpack.c.l.b16 %v90
    %v166 = vunpack.c.h.b16 %v90
    %v167 = vunpack.c.l.b16 %v91
    %v168 = vunpack.c.l.b16 %v92
    %v169 = vunpack.c.h.b16 %v92
    %v170 = vunpack.c.l.b16 %v93
    %v171 = vunpack.c.l.b16 %v94
    %v172 = vunpack.c.h.b16 %v94
    %v173 = vunpack.c.l.b16 %v95
    %v174 = vunpack.c.l.b16 %v96
    %v175 = vunpack.c.h.b16 %v96
    %v176 = vunpack.c.l.b16 %v97
    %v177 = vunpack.c.l.b16 %v98
    %v178 = vunpack.c.h.b16 %v98
    %v179 = vunpack.c.l.b16 %v99
    %v180 = vunpack.c.l.b16 %v100
    %v181 = vunpack.c.h.b16 %v100
    %v182 = vunpack.c.l.b16 %v101
    %v183 = vunpack.c.l.b16 %v102
    %v184 = vunpack.c.h.b16 %v102
    %v185 = vunpack.c.l.b16 %v103
    %v186 = vunpack.c.l.b16 %v104
    %v187 = vunpack.c.h.b16 %v104
    %v188 = vunpack.c.l.b16 %v105
    %v189 = vunpack.c.l.b16 %v106
    %v190 = vunpack.c.h.b16 %v106
    %v191 = vunpack.c.l.b16 %v107
    %v192 = vunpack.c.l.b16 %v108
    %v193 = vunpack.c.h.b16 %v108
    %v194 = vunpack.c.l.b16 %v109
    %v195 = vunpack.c.l.b16 %v110
    %v196 = vunpack.c.h.b16 %v110
    %v197 = vunpack.c.l.b16 %v111
    %v198 = vunpack.c.l.b16 %v112
    %v199 = vunpack.c.h.b16 %v112
    %v200 = vunpack.c.l.b16 %v113
    %v201 = vunpack.c.l.b16 %v114
    %v202 = vunpack.c.h.b16 %v114
    %v203 = vunpack.c.l.b16 %v115
    %v204 = vpack.c.b16 %v159, %v156
    %v205 = vpack.c.b16 %v160, %v157
    %v206 = vpack.c.b16 %v161, %v158
    %v207 = vpack.c.b16 %v165, %v162
    %v208 = vpack.c.b16 %v166, %v163
    %v209 = vpack.c.b16 %v167, %v164
    %v210 = vpack.c.b16 %v171, %v168
    %v211 = vpack.c.b16 %v172, %v169
    %v212 = vpack.c.b16 %v173, %v170
    %v213 = vpack.c.b16 %v177, %v174
    %v214 = vpack.c.b16 %v178, %v175
    %v215 = vpack.c.b16 %v179, %v176
    %v216 = vpack.c.b16 %v183, %v180
    %v217 = vpack.c.b16 %v184, %v181
    %v218 = vpack.c.b16 %v185, %v182
    %v219 = vpack.c.b16 %v189, %v186
    %v220 = vpack.c.b16 %v190, %v187
    %v221 = vpack.c.b16 %v191, %v188
    %v222 = vpack.c.b16 %v195, %v192
    %v223 = vpack.c.b16 %v196, %v193
    %v224 = vpack.c.b16 %v197, %v194
    %v225 = vpack.c.b16 %v201, %v198
    %v226 = vpack.c.b16 %v202, %v199
    %v227 = vpack.c.b16 %v203, %v200
    %252 = vmatpush.bf16.msra.mxu0 %v225
    %253 = vmatpush.bf16.msra.mxu0 %v222
    %254 = vmatpush.bf16.msra.mxu0 %v219
    %255 = vmatpush.bf16.msra.mxu0 %v216
    %256 = vmatpush.bf16.msra.mxu0 %v213
    %257 = vmatpush.bf16.msra.mxu0 %v210
    %258 = vmatpush.bf16.msra.mxu0 %v207
    %259 = vmatpush.bf16.msra.mxu0 %v204
    %260 = vmatmul.bf16.gmra.mxu0 %v76
    %v261 = vpop.f32.mrf.mxu0
    %v262 = vadd.f32 %v118, %v261
    %v263 = vpop.f32.mrf.mxu0
    %v264 = vadd.f32 %v118, %v263
    %265 = vmatmul.bf16.gmra.mxu0 %v77
    %v266 = vpop.f32.mrf.mxu0
    %v267 = vadd.f32 %v118, %v266
    %v268 = vpop.f32.mrf.mxu0
    %v269 = vadd.f32 %v118, %v268
    %270 = vmatmul.bf16.gmra.mxu0 %v78
    %v271 = vpop.f32.mrf.mxu0
    %v272 = vadd.f32 %v118, %v271
    %v273 = vpop.f32.mrf.mxu0
    %v274 = vadd.f32 %v118, %v273
    %275 = vmatmul.bf16.gmra.mxu0 %v79
    %v276 = vpop.f32.mrf.mxu0
    %v277 = vadd.f32 %v118, %v276
    %v278 = vpop.f32.mrf.mxu0
    %v279 = vadd.f32 %v118, %v278
    %280 = vmatmul.bf16.gmra.mxu0 %v80
    %v281 = vpop.f32.mrf.mxu0
    %v282 = vadd.f32 %v118, %v281
    %v283 = vpop.f32.mrf.mxu0
    %v284 = vadd.f32 %v118, %v283
    %285 = vmatmul.bf16.gmra.mxu0 %v81
    %v286 = vpop.f32.mrf.mxu0
    %v287 = vadd.f32 %v118, %v286
    %v288 = vpop.f32.mrf.mxu0
    %v289 = vadd.f32 %v118, %v288
    %290 = vmatmul.bf16.gmra.mxu0 %v82
    %v291 = vpop.f32.mrf.mxu0
    %v292 = vadd.f32 %v118, %v291
    %v293 = vpop.f32.mrf.mxu0
    %v294 = vadd.f32 %v118, %v293
    %295 = vmatmul.bf16.gmra.mxu0 %v83
    %v296 = vpop.f32.mrf.mxu0
    %v297 = vadd.f32 %v118, %v296
    %v298 = vpop.f32.mrf.mxu0
    %v299 = vadd.f32 %v118, %v298
    %300 = vdwg.mxu0
    %301 = vmatpush.bf16.msra.mxu0 %v226
    %302 = vmatpush.bf16.msra.mxu0 %v223
    %303 = vmatpush.bf16.msra.mxu0 %v220
    %304 = vmatpush.bf16.msra.mxu0 %v217
    %305 = vmatpush.bf16.msra.mxu0 %v214
    %306 = vmatpush.bf16.msra.mxu0 %v211
    %307 = vmatpush.bf16.msra.mxu0 %v208
    %308 = vmatpush.bf16.msra.mxu0 %v205
    %309 = vmatmul.bf16.gmra.mxu0 %v76
    %v310 = vpop.f32.mrf.mxu0
    %v311 = vadd.f32 %v119, %v310
    %v312 = vpop.f32.mrf.mxu0
    %v313 = vadd.f32 %v119, %v312
    %314 = vmatmul.bf16.gmra.mxu0 %v77
    %v315 = vpop.f32.mrf.mxu0
    %v316 = vadd.f32 %v119, %v315
    %v317 = vpop.f32.mrf.mxu0
    %v318 = vadd.f32 %v119, %v317
    %319 = vmatmul.bf16.gmra.mxu0 %v78
    %v320 = vpop.f32.mrf.mxu0
    %v321 = vadd.f32 %v119, %v320
    %v322 = vpop.f32.mrf.mxu0
    %v323 = vadd.f32 %v119, %v322
    %324 = vmatmul.bf16.gmra.mxu0 %v79
    %v325 = vpop.f32.mrf.mxu0
    %v326 = vadd.f32 %v119, %v325
    %v327 = vpop.f32.mrf.mxu0
    %v328 = vadd.f32 %v119, %v327
    %329 = vmatmul.bf16.gmra.mxu0 %v80
    %v330 = vpop.f32.mrf.mxu0
    %v331 = vadd.f32 %v119, %v330
    %v332 = vpop.f32.mrf.mxu0
    %v333 = vadd.f32 %v119, %v332
    %334 = vmatmul.bf16.gmra.mxu0 %v81
    %v335 = vpop.f32.mrf.mxu0
    %v336 = vadd.f32 %v119, %v335
    %v337 = vpop.f32.mrf.mxu0
    %v338 = vadd.f32 %v119, %v337
    %339 = vmatmul.bf16.gmra.mxu0 %v82
    %v340 = vpop.f32.mrf.mxu0
    %v341 = vadd.f32 %v119, %v340
    %v342 = vpop.f32.mrf.mxu0
    %v343 = vadd.f32 %v119, %v342
    %344 = vmatmul.bf16.gmra.mxu0 %v83
    %v345 = vpop.f32.mrf.mxu0
    %v346 = vadd.f32 %v119, %v345
    %v347 = vpop.f32.mrf.mxu0
    %v348 = vadd.f32 %v119, %v347
    %349 = vdwg.mxu0
    %350 = vmatpush.bf16.msra.mxu0 %v227
    %351 = vmatpush.bf16.msra.mxu0 %v224
    %352 = vmatpush.bf16.msra.mxu0 %v221
    %353 = vmatpush.bf16.msra.mxu0 %v218
    %354 = vmatpush.bf16.msra.mxu0 %v215
    %355 = vmatpush.bf16.msra.mxu0 %v212
    %356 = vmatpush.bf16.msra.mxu0 %v209
    %357 = vmatpush.bf16.msra.mxu0 %v206
    %358 = vmatmul.bf16.gmra.mxu0 %v76
    %v359 = vpop.f32.mrf.mxu0
    %v360 = vadd.f32 %v120, %v359
    %v361 = vpop.f32.mrf.mxu0
    %v362 = vadd.f32 %v120, %v361
    %363 = vmatmul.bf16.gmra.mxu0 %v77
    %v364 = vpop.f32.mrf.mxu0
    %v365 = vadd.f32 %v120, %v364
    %v366 = vpop.f32.mrf.mxu0
    %v367 = vadd.f32 %v120, %v366
    %368 = vmatmul.bf16.gmra.mxu0 %v78
    %v369 = vpop.f32.mrf.mxu0
    %v370 = vadd.f32 %v120, %v369
    %v371 = vpop.f32.mrf.mxu0
    %v372 = vadd.f32 %v120, %v371
    %373 = vmatmul.bf16.gmra.mxu0 %v79
    %v374 = vpop.f32.mrf.mxu0
    %v375 = vadd.f32 %v120, %v374
    %v376 = vpop.f32.mrf.mxu0
    %v377 = vadd.f32 %v120, %v376
    %378 = vmatmul.bf16.gmra.mxu0 %v80
    %v379 = vpop.f32.mrf.mxu0
    %v380 = vadd.f32 %v120, %v379
    %v381 = vpop.f32.mrf.mxu0
    %v382 = vadd.f32 %v120, %v381
    %383 = vmatmul.bf16.gmra.mxu0 %v81
    %v384 = vpop.f32.mrf.mxu0
    %v385 = vadd.f32 %v120, %v384
    %v386 = vpop.f32.mrf.mxu0
    %v387 = vadd.f32 %v120, %v386
    %388 = vmatmul.bf16.gmra.mxu0 %v82
    %v389 = vpop.f32.mrf.mxu0
    %v390 = vadd.f32 %v120, %v389
    %v391 = vpop.f32.mrf.mxu0
    %v392 = vadd.f32 %v120, %v391
    %393 = vmatmul.bf16.gmra.mxu0 %v83
    %v394 = vpop.f32.mrf.mxu0
    %v395 = vadd.f32 %v120, %v394
    %v396 = vpop.f32.mrf.mxu0
    %v397 = vadd.f32 %v120, %v396
    %398 = vdwg.mxu0
    %v399 = vpack.c.bf16 %v311, %v262
    %v400 = vpack.c.bf16 %v360, %v360
    %v401 = vpack.c.bf16 %v313, %v264
    %v402 = vpack.c.bf16 %v362, %v362
    %v403 = vpack.c.bf16 %v316, %v267
    %v404 = vpack.c.bf16 %v365, %v365
    %v405 = vpack.c.bf16 %v318, %v269
    %v406 = vpack.c.bf16 %v367, %v367
    %v407 = vpack.c.bf16 %v321, %v272
    %v408 = vpack.c.bf16 %v370, %v370
    %v409 = vpack.c.bf16 %v323, %v274
    %v410 = vpack.c.bf16 %v372, %v372
    %v411 = vpack.c.bf16 %v326, %v277
    %v412 = vpack.c.bf16 %v375, %v375
    %v413 = vpack.c.bf16 %v328, %v279
    %v414 = vpack.c.bf16 %v377, %v377
    %v415 = vpack.c.bf16 %v331, %v282
    %v416 = vpack.c.bf16 %v380, %v380
    %v417 = vpack.c.bf16 %v333, %v284
    %v418 = vpack.c.bf16 %v382, %v382
    %v419 = vpack.c.bf16 %v336, %v287
    %v420 = vpack.c.bf16 %v385, %v385
    %v421 = vpack.c.bf16 %v338, %v289
    %v422 = vpack.c.bf16 %v387, %v387
    %v423 = vpack.c.bf16 %v341, %v292
    %v424 = vpack.c.bf16 %v390, %v390
    %v425 = vpack.c.bf16 %v343, %v294
    %v426 = vpack.c.bf16 %v392, %v392
    %v427 = vpack.c.bf16 %v346, %v297
    %v428 = vpack.c.bf16 %v395, %v395
    %v429 = vpack.c.bf16 %v348, %v299
    %v430 = vpack.c.bf16 %v397, %v397
    %431 = vst [vmem:[#allocation8] sm:$0xff] %v399
    %432 = vst [vmem:[#allocation8 + $0x8] sm:$0xf] %v400
    %433 = vst [vmem:[#allocation8 + $0xc] sm:$0xff] %v401
    %434 = vst [vmem:[#allocation8 + $0x14] sm:$0xf] %v402
    %435 = vst [vmem:[#allocation8 + $0x18] sm:$0xff] %v403
    %436 = vst [vmem:[#allocation8 + $0x20] sm:$0xf] %v404
    %437 = vst [vmem:[#allocation8 + $0x24] sm:$0xff] %v405
    %438 = vst [vmem:[#allocation8 + $0x2c] sm:$0xf] %v406
    %439 = vst [vmem:[#allocation8 + $0x30] sm:$0xff] %v407
    %440 = vst [vmem:[#allocation8 + $0x38] sm:$0xf] %v408
    %441 = vst [vmem:[#allocation8 + $0x3c] sm:$0xff] %v409
    %442 = vst [vmem:[#allocation8 + $0x44] sm:$0xf] %v410
    %443 = vst [vmem:[#allocation8 + $0x48] sm:$0xff] %v411
    %444 = vst [vmem:[#allocation8 + $0x50] sm:$0xf] %v412
    %445 = vst [vmem:[#allocation8 + $0x54] sm:$0xff] %v413
    %446 = vst [vmem:[#allocation8 + $0x5c] sm:$0xf] %v414
    %447 = vst [vmem:[#allocation8 + $0x60] sm:$0xff] %v415
    %448 = vst [vmem:[#allocation8 + $0x68] sm:$0xf] %v416
    %449 = vst [vmem:[#allocation8 + $0x6c] sm:$0xff] %v417
    %450 = vst [vmem:[#allocation8 + $0x74] sm:$0xf] %v418
    %451 = vst [vmem:[#allocation8 + $0x78] sm:$0xff] %v419
    %452 = vst [vmem:[#allocation8 + $0x80] sm:$0xf] %v420
    %453 = vst [vmem:[#allocation8 + $0x84] sm:$0xff] %v421
    %454 = vst [vmem:[#allocation8 + $0x8c] sm:$0xf] %v422
    %455 = vst [vmem:[#allocation8 + $0x90] sm:$0xff] %v423
    %456 = vst [vmem:[#allocation8 + $0x98] sm:$0xf] %v424
    %457 = vst [vmem:[#allocation8 + $0x9c] sm:$0xff] %v425
    %458 = vst [vmem:[#allocation8 + $0xa4] sm:$0xf] %v426
    %459 = vst [vmem:[#allocation8 + $0xa8] sm:$0xff] %v427
    %460 = vst [vmem:[#allocation8 + $0xb0] sm:$0xf] %v428
    %461 = vst [vmem:[#allocation8 + $0xb4] sm:$0xff] %v429
    %462 = vst [vmem:[#allocation8 + $0xbc] sm:$0xf] %v430
    // Predicated region
    $region26: #{tpu_custom_call.1} parent=1 // pred_check
      _
    $region27: #{tpu_custom_call.1} parent=1 // pred_check_branch
      %464 = sbr.rel (0) target = $region29
    $region28: #{tpu_custom_call.1} parent=1 // pred_region
      %466 = vsyncadd [#allocation4], 0
      %s467 = sshll.u32 [#allocation8], 4
      %s468 = int_to_ptr.vmem [resolvable:$true] %s467
      %s469 = sshll.u32 %s3, 4
      %s470 = int_to_ptr.hbm [resolvable:$true] %s469
      %475 = dma.vmem_to_hbm [thread:$0]  %s468, 3072, %s470, [#allocation4], 192, 192, 12
    $region29: #{tpu_custom_call.1} parent=1 // pred_fallthru
      _
    // Predicated region
    $region30: #{tpu_custom_call.1} parent=1 // pred_check
      _
    $region31: #{tpu_custom_call.1} parent=1 // pred_check_branch
      %477 = sbr.rel (0) target = $region33
    $region32: #{tpu_custom_call.1} parent=1 // pred_region
      %479 = dma.done [#allocation4], 3072
    $region33: #{tpu_custom_call.1} parent=1 // pred_fallthru
      _
    %480 = vsyncpa [#allocation3], 1
    %481 = vsyncpa [#allocation6], 1
    %482 = vsyncpa [#allocation4], 1

// kernel: tpu_custom_call.1
$region0: #{tpu_custom_call.1}
  #allocation0 [shape = 'u32[]', space=smem, size = 0x4, offset = 0x4, fixed_abs, tag = 'smem constant byte address 0x4 - core index']
  #allocation1 [shape = 'u32[72,128]{1,0:T(1,128)}', space=vmem, size = 0x9000, scoped, tag = 'internal scratch']
  %s0 = inlined_call_operand.hbm [shape: f32[128,128], index: 0, kind: input, shape index: {}]
  %s1 = inlined_call_operand.hbm [shape: bf16[128,384], index: 1, kind: input, shape index: {}]
  %s2 = inlined_call_operand.hbm [shape: f32[1,384], index: 2, kind: input, shape index: {}]
  %s3 = inlined_call_operand.hbm [shape: bf16[128,384], index: 3, kind: output, shape index: {}]
  %s4 = sld [smem:[#allocation0]]
  $region34: #{tpu_custom_call.1} parent=0
    _
  %s6 = ssub.s32 1, %s4
  %s7 = scalar_select 0, %s6, %s4
  $region1: #{tpu_custom_call.1} parent=0
    #allocation2 [shape = 'u8[65536]{0}', space=vmem, size = 0x10000, scoped, tag = 'input window, operand 0, single buffered']
    #allocation3 [shape = 's32[1]{0}', space=sflag, size = 0x4, scoped, tag = 'scoped memory for tpu_custom_call.1']
    #allocation4 [shape = 's32[1]{0}', space=sflag, size = 0x4, scoped, tag = 'scoped memory for tpu_custom_call.1']
    #allocation5 [shape = 'u8[98304]{0}', space=vmem, size = 0x18000, scoped, tag = 'input window, operand 1, single buffered']
    #allocation6 [shape = 's32[1]{0}', space=sflag, size = 0x4, scoped, tag = 'scoped memory for tpu_custom_call.1']
    #allocation7 [shape = 'u8[1536]{0}', space=vmem, size = 0x800, scoped, tag = 'input window, operand 2, single buffered']
    #allocation8 [shape = 'u8[98304]{0}', space=vmem, size = 0x18000, scoped, tag = 'output window, operand 0, single buffered']
    %8 = vsyncpa [#allocation3], 0
    %9 = vsyncpa [#allocation6], 0
    %10 = vsyncpa [#allocation4], 0
    // Predicated region
    $region2: #{tpu_custom_call.1} parent=1 // pred_check
      _
    $region3: #{tpu_custom_call.1} parent=1 // pred_check_branch
      %12 = sbr.rel (0) target = $region5
    $region4: #{tpu_custom_call.1} parent=1 // pred_region
      %14 = vsyncadd [#allocation3], 0
      %s15 = sshll.u32 %s0, 4
      %s16 = int_to_ptr.hbm [resolvable:$true] %s15
      %s17 = sshll.u32 [#allocation2], 4
      %s18 = int_to_ptr.vmem [resolvable:$true] %s17
      %23 = dma.hbm_to_vmem [thread:$0]  %s16, 2048, %s18, [#allocation3], 128, 128, 8
    $region5: #{tpu_custom_call.1} parent=1 // pred_fallthru
      _
    // Predicated region
    $region6: #{tpu_custom_call.1} parent=1 // pred_check
      _
    $region7: #{tpu_custom_call.1} parent=1 // pred_check_branch
      %25 = sbr.rel (0) target = $region9
    $region8: #{tpu_custom_call.1} parent=1 // pred_region
      %27 = vsyncadd [#allocation6], 0
      %s28 = sshll.u32 %s1, 4
      %s29 = int_to_ptr.hbm [resolvable:$true] %s28
      %s30 = sshll.u32 [#allocation5], 4
      %s31 = int_to_ptr.vmem [resolvable:$true] %s30
      %36 = dma.hbm_to_vmem [thread:$0]  %s29, 3072, %s31, [#allocation6], 192, 192, 12
    $region9: #{tpu_custom_call.1} parent=1 // pred_fallthru
      _
    // Predicated region
    $region10: #{tpu_custom_call.1} parent=1 // pred_check
      _
    $region11: #{tpu_custom_call.1} parent=1 // pred_check_branch
      %38 = sbr.rel (0) target = $region13
    $region12: #{tpu_custom_call.1} parent=1 // pred_region
      %40 = vsyncadd [#allocation6], 0
      %s42 = sshll.u32 %s2, 4
      %s43 = int_to_ptr.hbm [resolvable:$true] %s42
      %s44 = sshll.u32 [#allocation7], 4
      %s45 = int_to_ptr.vmem [resolvable:$true] %s44
      %47 = dma.hbm_to_vmem [thread:$0]  %s43, 48, %s45, [#allocation6]
    $region13: #{tpu_custom_call.1} parent=1 // pred_fallthru
      _
    // Predicated region
    $region14: #{tpu_custom_call.1} parent=1 // pred_check
      _
    $region15: #{tpu_custom_call.1} parent=1 // pred_check_branch
      %49 = sbr.rel (0) target = $region17
    $region16: #{tpu_custom_call.1} parent=1 // pred_region
      %51 = dma.done [#allocation3], 2048
    $region17: #{tpu_custom_call.1} parent=1 // pred_fallthru
      _
    // Predicated region
    $region18: #{tpu_custom_call.1} parent=1 // pred_check
      _
    $region19: #{tpu_custom_call.1} parent=1 // pred_check_branch
      %53 = sbr.rel (0) target = $region21
    $region20: #{tpu_custom_call.1} parent=1 // pred_region
      %55 = dma.done [#allocation6], 3072
    $region21: #{tpu_custom_call.1} parent=1 // pred_fallthru
      _
    // Predicated region
    $region22: #{tpu_custom_call.1} parent=1 // pred_check
      _
    $region23: #{tpu_custom_call.1} parent=1 // pred_check_branch
      %57 = sbr.rel (0) target = $region25
    $region24: #{tpu_custom_call.1} parent=1 // pred_region
      %59 = dma.done [#allocation6], 48
    $region25: #{tpu_custom_call.1} parent=1 // pred_fallthru
      _
    %v60 = vld [vmem:[#allocation2] sm:$0xff]
    %v61 = vld [vmem:[#allocation2 + $0x8] sm:$0xff]
    %v62 = vld [vmem:[#allocation2 + $0x10] sm:$0xff]
    %v63 = vld [vmem:[#allocation2 + $0x18] sm:$0xff]
    %v64 = vld [vmem:[#allocation2 + $0x20] sm:$0xff]
    %v65 = vld [vmem:[#allocation2 + $0x28] sm:$0xff]
    %v66 = vld [vmem:[#allocation2 + $0x30] sm:$0xff]
    %v67 = vld [vmem:[#allocation2 + $0x38] sm:$0xff]
    %v68 = vld [vmem:[#allocation2 + $0x40] sm:$0xff]
    %v69 = vld [vmem:[#allocation2 + $0x48] sm:$0xff]
    %v70 = vld [vmem:[#allocation2 + $0x50] sm:$0xff]
    %v71 = vld [vmem:[#allocation2 + $0x58] sm:$0xff]
    %v72 = vld [vmem:[#allocation2 + $0x60] sm:$0xff]
    %v73 = vld [vmem:[#allocation2 + $0x68] sm:$0xff]
    %v74 = vld [vmem:[#allocation2 + $0x70] sm:$0xff]
    %v75 = vld [vmem:[#allocation2 + $0x78] sm:$0xff]
    %v76 = vpack.c.bf16 %v61, %v60
    %v77 = vpack.c.bf16 %v63, %v62
    %v78 = vpack.c.bf16 %v65, %v64
    %v79 = vpack.c.bf16 %v67, %v66
    %v80 = vpack.c.bf16 %v69, %v68
    %v81 = vpack.c.bf16 %v71, %v70
    %v82 = vpack.c.bf16 %v73, %v72
    %v83 = vpack.c.bf16 %v75, %v74
    %v84 = vld [vmem:[#allocation5] sm:$0xff]
    %v85 = vld [vmem:[#allocation5 + $0x8] sm:$0xf]
    %v86 = vld [vmem:[#allocation5 + $0xc] sm:$0xff]
    %v87 = vld [vmem:[#allocation5 + $0x14] sm:$0xf]
    %v88 = vld [vmem:[#allocation5 + $0x18] sm:$0xff]
    %v89 = vld [vmem:[#allocation5 + $0x20] sm:$0xf]
    %v90 = vld [vmem:[#allocation5 + $0x24] sm:$0xff]
    %v91 = vld [vmem:[#allocation5 + $0x2c] sm:$0xf]
    %v92 = vld [vmem:[#allocation5 + $0x30] sm:$0xff]
    %v93 = vld [vmem:[#allocation5 + $0x38] sm:$0xf]
    %v94 = vld [vmem:[#allocation5 + $0x3c] sm:$0xff]
    %v95 = vld [vmem:[#allocation5 + $0x44] sm:$0xf]
    %v96 = vld [vmem:[#allocation5 + $0x48] sm:$0xff]
    %v97 = vld [vmem:[#allocation5 + $0x50] sm:$0xf]
    %v98 = vld [vmem:[#allocation5 + $0x54] sm:$0xff]
    %v99 = vld [vmem:[#allocation5 + $0x5c] sm:$0xf]
    %v100 = vld [vmem:[#allocation5 + $0x60] sm:$0xff]
    %v101 = vld [vmem:[#allocation5 + $0x68] sm:$0xf]
    %v102 = vld [vmem:[#allocation5 + $0x6c] sm:$0xff]
    %v103 = vld [vmem:[#allocation5 + $0x74] sm:$0xf]
    %v104 = vld [vmem:[#allocation5 + $0x78] sm:$0xff]
    %v105 = vld [vmem:[#allocation5 + $0x80] sm:$0xf]
    %v106 = vld [vmem:[#allocation5 + $0x84] sm:$0xff]
    %v107 = vld [vmem:[#allocation5 + $0x8c] sm:$0xf]
    %v108 = vld [vmem:[#allocation5 + $0x90] sm:$0xff]
    %v109 = vld [vmem:[#allocation5 + $0x98] sm:$0xf]
    %v110 = vld [vmem:[#allocation5 + $0x9c] sm:$0xff]
    %v111 = vld [vmem:[#allocation5 + $0xa4] sm:$0xf]
    %v112 = vld [vmem:[#allocation5 + $0xa8] sm:$0xff]
    %v113 = vld [vmem:[#allocation5 + $0xb0] sm:$0xf]
    %v114 = vld [vmem:[#allocation5 + $0xb4] sm:$0xff]
    %v115 = vld [vmem:[#allocation5 + $0xbc] sm:$0xf]
    %v116 = vld [vmem:[#allocation7] sm:$0x7]
    %v118 = vperm.slane %v116, 0
    %v119 = vperm.slane %v116, 1
    %v120 = vperm.slane %v116, 2
    %v156 = vunpack.c.l.b16 %v84
    %v157 = vunpack.c.h.b16 %v84
    %v158 = vunpack.c.l.b16 %v85
    %v159 = vunpack.c.l.b16 %v86
    %v160 = vunpack.c.h.b16 %v86
    %v161 = vunpack.c.l.b16 %v87
    %v162 = vunpack.c.l.b16 %v88
    %v163 = vunpack.c.h.b16 %v88
    %v164 = vunpack.c.l.b16 %v89
    %v165 = vunpack.c.l.b16 %v90
    %v166 = vunpack.c.h.b16 %v90
    %v167 = vunpack.c.l.b16 %v91
    %v168 = vunpack.c.l.b16 %v92
    %v169 = vunpack.c.h.b16 %v92
    %v170 = vunpack.c.l.b16 %v93
    %v171 = vunpack.c.l.b16 %v94
    %v172 = vunpack.c.h.b16 %v94
    %v173 = vunpack.c.l.b16 %v95
    %v174 = vunpack.c.l.b16 %v96
    %v175 = vunpack.c.h.b16 %v96
    %v176 = vunpack.c.l.b16 %v97
    %v177 = vunpack.c.l.b16 %v98
    %v178 = vunpack.c.h.b16 %v98
    %v179 = vunpack.c.l.b16 %v99
    %v180 = vunpack.c.l.b16 %v100
    %v181 = vunpack.c.h.b16 %v100
    %v182 = vunpack.c.l.b16 %v101
    %v183 = vunpack.c.l.b16 %v102
    %v184 = vunpack.c.h.b16 %v102
    %v185 = vunpack.c.l.b16 %v103
    %v186 = vunpack.c.l.b16 %v104
    %v187 = vunpack.c.h.b16 %v104
    %v188 = vunpack.c.l.b16 %v105
    %v189 = vunpack.c.l.b16 %v106
    %v190 = vunpack.c.h.b16 %v106
    %v191 = vunpack.c.l.b16 %v107
    %v192 = vunpack.c.l.b16 %v108
    %v193 = vunpack.c.h.b16 %v108
    %v194 = vunpack.c.l.b16 %v109
    %v195 = vunpack.c.l.b16 %v110
    %v196 = vunpack.c.h.b16 %v110
    %v197 = vunpack.c.l.b16 %v111
    %v198 = vunpack.c.l.b16 %v112
    %v199 = vunpack.c.h.b16 %v112
    %v200 = vunpack.c.l.b16 %v113
    %v201 = vunpack.c.l.b16 %v114
    %v202 = vunpack.c.h.b16 %v114
    %v203 = vunpack.c.l.b16 %v115
    %v204 = vpack.c.b16 %v159, %v156
    %v205 = vpack.c.b16 %v160, %v157
    %v206 = vpack.c.b16 %v161, %v158
    %v207 = vpack.c.b16 %v165, %v162
    %v208 = vpack.c.b16 %v166, %v163
    %v209 = vpack.c.b16 %v167, %v164
    %v210 = vpack.c.b16 %v171, %v168
    %v211 = vpack.c.b16 %v172, %v169
    %v212 = vpack.c.b16 %v173, %v170
    %v213 = vpack.c.b16 %v177, %v174
    %v214 = vpack.c.b16 %v178, %v175
    %v215 = vpack.c.b16 %v179, %v176
    %v216 = vpack.c.b16 %v183, %v180
    %v217 = vpack.c.b16 %v184, %v181
    %v218 = vpack.c.b16 %v185, %v182
    %v219 = vpack.c.b16 %v189, %v186
    %v220 = vpack.c.b16 %v190, %v187
    %v221 = vpack.c.b16 %v191, %v188
    %v222 = vpack.c.b16 %v195, %v192
    %v223 = vpack.c.b16 %v196, %v193
    %v224 = vpack.c.b16 %v197, %v194
    %v225 = vpack.c.b16 %v201, %v198
    %v226 = vpack.c.b16 %v202, %v199
    %v227 = vpack.c.b16 %v203, %v200
    %252 = vmatpush.bf16.msra.mxu0 %v225
    %253 = vmatpush.bf16.msra.mxu0 %v222
    %254 = vmatpush.bf16.msra.mxu0 %v219
    %255 = vmatpush.bf16.msra.mxu0 %v216
    %256 = vmatpush.bf16.msra.mxu0 %v213
    %257 = vmatpush.bf16.msra.mxu0 %v210
    %258 = vmatpush.bf16.msra.mxu0 %v207
    %259 = vmatpush.bf16.msra.mxu0 %v204
    %260 = vmatmul.bf16.gmra.mxu0 %v76
    %v261 = vpop.f32.mrf.mxu0
    %v262 = vadd.f32 %v118, %v261
    %v263 = vpop.f32.mrf.mxu0
    %v264 = vadd.f32 %v118, %v263
    %265 = vmatmul.bf16.gmra.mxu0 %v77
    %v266 = vpop.f32.mrf.mxu0
    %v267 = vadd.f32 %v118, %v266
    %v268 = vpop.f32.mrf.mxu0
    %v269 = vadd.f32 %v118, %v268
    %270 = vmatmul.bf16.gmra.mxu0 %v78
    %v271 = vpop.f32.mrf.mxu0
    %v272 = vadd.f32 %v118, %v271
    %v273 = vpop.f32.mrf.mxu0
    %v274 = vadd.f32 %v118, %v273
    %275 = vmatmul.bf16.gmra.mxu0 %v79
    %v276 = vpop.f32.mrf.mxu0
    %v277 = vadd.f32 %v118, %v276
    %v278 = vpop.f32.mrf.mxu0
    %v279 = vadd.f32 %v118, %v278
    %280 = vmatmul.bf16.gmra.mxu0 %v80
    %v281 = vpop.f32.mrf.mxu0
    %v282 = vadd.f32 %v118, %v281
    %v283 = vpop.f32.mrf.mxu0
    %v284 = vadd.f32 %v118, %v283
    %285 = vmatmul.bf16.gmra.mxu0 %v81
    %v286 = vpop.f32.mrf.mxu0
    %v287 = vadd.f32 %v118, %v286
    %v288 = vpop.f32.mrf.mxu0
    %v289 = vadd.f32 %v118, %v288
    %290 = vmatmul.bf16.gmra.mxu0 %v82
    %v291 = vpop.f32.mrf.mxu0
    %v292 = vadd.f32 %v118, %v291
    %v293 = vpop.f32.mrf.mxu0
    %v294 = vadd.f32 %v118, %v293
    %295 = vmatmul.bf16.gmra.mxu0 %v83
    %v296 = vpop.f32.mrf.mxu0
    %v297 = vadd.f32 %v118, %v296
    %v298 = vpop.f32.mrf.mxu0
    %v299 = vadd.f32 %v118, %v298
    %300 = vdwg.mxu0
    %301 = vmatpush.bf16.msra.mxu0 %v226
    %302 = vmatpush.bf16.msra.mxu0 %v223
    %303 = vmatpush.bf16.msra.mxu0 %v220
    %304 = vmatpush.bf16.msra.mxu0 %v217
    %305 = vmatpush.bf16.msra.mxu0 %v214
    %306 = vmatpush.bf16.msra.mxu0 %v211
    %307 = vmatpush.bf16.msra.mxu0 %v208
    %308 = vmatpush.bf16.msra.mxu0 %v205
    %309 = vmatmul.bf16.gmra.mxu0 %v76
    %v310 = vpop.f32.mrf.mxu0
    %v311 = vadd.f32 %v119, %v310
    %v312 = vpop.f32.mrf.mxu0
    %v313 = vadd.f32 %v119, %v312
    %314 = vmatmul.bf16.gmra.mxu0 %v77
    %v315 = vpop.f32.mrf.mxu0
    %v316 = vadd.f32 %v119, %v315
    %v317 = vpop.f32.mrf.mxu0
    %v318 = vadd.f32 %v119, %v317
    %319 = vmatmul.bf16.gmra.mxu0 %v78
    %v320 = vpop.f32.mrf.mxu0
    %v321 = vadd.f32 %v119, %v320
    %v322 = vpop.f32.mrf.mxu0
    %v323 = vadd.f32 %v119, %v322
    %324 = vmatmul.bf16.gmra.mxu0 %v79
    %v325 = vpop.f32.mrf.mxu0
    %v326 = vadd.f32 %v119, %v325
    %v327 = vpop.f32.mrf.mxu0
    %v328 = vadd.f32 %v119, %v327
    %329 = vmatmul.bf16.gmra.mxu0 %v80
    %v330 = vpop.f32.mrf.mxu0
    %v331 = vadd.f32 %v119, %v330
    %v332 = vpop.f32.mrf.mxu0
    %v333 = vadd.f32 %v119, %v332
    %334 = vmatmul.bf16.gmra.mxu0 %v81
    %v335 = vpop.f32.mrf.mxu0
    %v336 = vadd.f32 %v119, %v335
    %v337 = vpop.f32.mrf.mxu0
    %v338 = vadd.f32 %v119, %v337
    %339 = vmatmul.bf16.gmra.mxu0 %v82
    %v340 = vpop.f32.mrf.mxu0
    %v341 = vadd.f32 %v119, %v340
    %v342 = vpop.f32.mrf.mxu0
    %v343 = vadd.f32 %v119, %v342
    %344 = vmatmul.bf16.gmra.mxu0 %v83
    %v345 = vpop.f32.mrf.mxu0
    %v346 = vadd.f32 %v119, %v345
    %v347 = vpop.f32.mrf.mxu0
    %v348 = vadd.f32 %v119, %v347
    %349 = vdwg.mxu0
    %350 = vmatpush.bf16.msra.mxu0 %v227
    %351 = vmatpush.bf16.msra.mxu0 %v224
    %352 = vmatpush.bf16.msra.mxu0 %v221
    %353 = vmatpush.bf16.msra.mxu0 %v218
    %354 = vmatpush.bf16.msra.mxu0 %v215
    %355 = vmatpush.bf16.msra.mxu0 %v212
    %356 = vmatpush.bf16.msra.mxu0 %v209
    %357 = vmatpush.bf16.msra.mxu0 %v206
    %358 = vmatmul.bf16.gmra.mxu0 %v76
    %v359 = vpop.f32.mrf.mxu0
    %v360 = vadd.f32 %v120, %v359
    %v361 = vpop.f32.mrf.mxu0
    %v362 = vadd.f32 %v120, %v361
    %363 = vmatmul.bf16.gmra.mxu0 %v77
    %v364 = vpop.f32.mrf.mxu0
    %v365 = vadd.f32 %v120, %v364
    %v366 = vpop.f32.mrf.mxu0
    %v367 = vadd.f32 %v120, %v366
    %368 = vmatmul.bf16.gmra.mxu0 %v78
    %v369 = vpop.f32.mrf.mxu0
    %v370 = vadd.f32 %v120, %v369
    %v371 = vpop.f32.mrf.mxu0
    %v372 = vadd.f32 %v120, %v371
    %373 = vmatmul.bf16.gmra.mxu0 %v79
    %v374 = vpop.f32.mrf.mxu0
    %v375 = vadd.f32 %v120, %v374
    %v376 = vpop.f32.mrf.mxu0
    %v377 = vadd.f32 %v120, %v376
    %378 = vmatmul.bf16.gmra.mxu0 %v80
    %v379 = vpop.f32.mrf.mxu0
    %v380 = vadd.f32 %v120, %v379
    %v381 = vpop.f32.mrf.mxu0
    %v382 = vadd.f32 %v120, %v381
    %383 = vmatmul.bf16.gmra.mxu0 %v81
    %v384 = vpop.f32.mrf.mxu0
    %v385 = vadd.f32 %v120, %v384
    %v386 = vpop.f32.mrf.mxu0
    %v387 = vadd.f32 %v120, %v386
    %388 = vmatmul.bf16.gmra.mxu0 %v82
    %v389 = vpop.f32.mrf.mxu0
    %v390 = vadd.f32 %v120, %v389
    %v391 = vpop.f32.mrf.mxu0
    %v392 = vadd.f32 %v120, %v391
    %393 = vmatmul.bf16.gmra.mxu0 %v83
    %v394 = vpop.f32.mrf.mxu0
    %v395 = vadd.f32 %v120, %v394
    %v396 = vpop.f32.mrf.mxu0
    %v397 = vadd.f32 %v120, %v396
    %398 = vdwg.mxu0
    %v399 = vpack.c.bf16 %v311, %v262
    %v400 = vpack.c.bf16 %v360, %v360
    %v401 = vpack.c.bf16 %v313, %v264
    %v402 = vpack.c.bf16 %v362, %v362
    %v403 = vpack.c.bf16 %v316, %v267
    %v404 = vpack.c.bf16 %v365, %v365
    %v405 = vpack.c.bf16 %v318, %v269
    %v406 = vpack.c.bf16 %v367, %v367
    %v407 = vpack.c.bf16 %v321, %v272
    %v408 = vpack.c.bf16 %v370, %v370
    %v409 = vpack.c.bf16 %v323, %v274
    %v410 = vpack.c.bf16 %v372, %v372
    %v411 = vpack.c.bf16 %v326, %v277
    %v412 = vpack.c.bf16 %v375, %v375
    %v413 = vpack.c.bf16 %v328, %v279
    %v414 = vpack.c.bf16 %v377, %v377
    %v415 = vpack.c.bf16 %v331, %v282
    %v416 = vpack.c.bf16 %v380, %v380
    %v417 = vpack.c.bf16 %v333, %v284
    %v418 = vpack.c.bf16 %v382, %v382
    %v419 = vpack.c.bf16 %v336, %v287
    %v420 = vpack.c.bf16 %v385, %v385
    %v421 = vpack.c.bf16 %v338, %v289
    %v422 = vpack.c.bf16 %v387, %v387
    %v423 = vpack.c.bf16 %v341, %v292
    %v424 = vpack.c.bf16 %v390, %v390
    %v425 = vpack.c.bf16 %v343, %v294
    %v426 = vpack.c.bf16 %v392, %v392
    %v427 = vpack.c.bf16 %v346, %v297
    %v428 = vpack.c.bf16 %v395, %v395
    %v429 = vpack.c.bf16 %v348, %v299
    %v430 = vpack.c.bf16 %v397, %v397
    %431 = vst [vmem:[#allocation8] sm:$0xff] %v399
    %432 = vst [vmem:[#allocation8 + $0x8] sm:$0xf] %v400
    %433 = vst [vmem:[#allocation8 + $0xc] sm:$0xff] %v401
    %434 = vst [vmem:[#allocation8 + $0x14] sm:$0xf] %v402
    %435 = vst [vmem:[#allocation8 + $0x18] sm:$0xff] %v403
    %436 = vst [vmem:[#allocation8 + $0x20] sm:$0xf] %v404
    %437 = vst [vmem:[#allocation8 + $0x24] sm:$0xff] %v405
    %438 = vst [vmem:[#allocation8 + $0x2c] sm:$0xf] %v406
    %439 = vst [vmem:[#allocation8 + $0x30] sm:$0xff] %v407
    %440 = vst [vmem:[#allocation8 + $0x38] sm:$0xf] %v408
    %441 = vst [vmem:[#allocation8 + $0x3c] sm:$0xff] %v409
    %442 = vst [vmem:[#allocation8 + $0x44] sm:$0xf] %v410
    %443 = vst [vmem:[#allocation8 + $0x48] sm:$0xff] %v411
    %444 = vst [vmem:[#allocation8 + $0x50] sm:$0xf] %v412
    %445 = vst [vmem:[#allocation8 + $0x54] sm:$0xff] %v413
    %446 = vst [vmem:[#allocation8 + $0x5c] sm:$0xf] %v414
    %447 = vst [vmem:[#allocation8 + $0x60] sm:$0xff] %v415
    %448 = vst [vmem:[#allocation8 + $0x68] sm:$0xf] %v416
    %449 = vst [vmem:[#allocation8 + $0x6c] sm:$0xff] %v417
    %450 = vst [vmem:[#allocation8 + $0x74] sm:$0xf] %v418
    %451 = vst [vmem:[#allocation8 + $0x78] sm:$0xff] %v419
    %452 = vst [vmem:[#allocation8 + $0x80] sm:$0xf] %v420
    %453 = vst [vmem:[#allocation8 + $0x84] sm:$0xff] %v421
    %454 = vst [vmem:[#allocation8 + $0x8c] sm:$0xf] %v422
    %455 = vst [vmem:[#allocation8 + $0x90] sm:$0xff] %v423
    %456 = vst [vmem:[#allocation8 + $0x98] sm:$0xf] %v424
    %457 = vst [vmem:[#allocation8 + $0x9c] sm:$0xff] %v425
    %458 = vst [vmem:[#allocation8 + $0xa4] sm:$0xf] %v426
    %459 = vst [vmem:[#allocation8 + $0xa8] sm:$0xff] %v427
    %460 = vst [vmem:[#allocation8 + $0xb0] sm:$0xf] %v428
    %461 = vst [vmem:[#allocation8 + $0xb4] sm:$0xff] %v429
    %462 = vst [vmem:[#allocation8 + $0xbc] sm:$0xf] %v430
    // Predicated region
    $region26: #{tpu_custom_call.1} parent=1 // pred_check
      _
    $region27: #{tpu_custom_call.1} parent=1 // pred_check_branch
      %464 = sbr.rel (0) target = $region29
    $region28: #{tpu_custom_call.1} parent=1 // pred_region
      %466 = vsyncadd [#allocation4], 0
      %s467 = sshll.u32 [#allocation8], 4
      %s468 = int_to_ptr.vmem [resolvable:$true] %s467
      %s469 = sshll.u32 %s3, 4
      %s470 = int_to_ptr.hbm [resolvable:$true] %s469
      %475 = dma.vmem_to_hbm [thread:$0]  %s468, 3072, %s470, [#allocation4], 192, 192, 12
    $region29: #{tpu_custom_call.1} parent=1 // pred_fallthru
      _
    // Predicated region
    $region30: #{tpu_custom_call.1} parent=1 // pred_check
      _
    $region31: #{tpu_custom_call.1} parent=1 // pred_check_branch
      %477 = sbr.rel (0) target = $region33
    $region32: #{tpu_custom_call.1} parent=1 // pred_region
      %479 = dma.done [#allocation4], 3072
    $region33: #{tpu_custom_call.1} parent=1 // pred_fallthru
      _
    %480 = vsyncpa [#allocation3], 1
    %481 = vsyncpa [#allocation6], 1
    %482 = vsyncpa [#allocation4], 1

</llo_original>
